<compile_context>
chip_gen: v5e
topology: v5e:2x2
jax: 0.10.0
libtpu: 0.0.40
codegen_flags: <defaults>
</compile_context>

<pallas_src>
import functools
import math

import jax
import jax.numpy as jnp
from jax.experimental import pallas as pl
from jax.experimental.pallas import tpu as pltpu


def temporal_block_kernel(*refs, kernel_size, dilation, has_downsample,
                          compute_dtype):
    if has_downsample:
        (x_ref, w1_ref, b1_ref, w2_ref, b2_ref, wd_ref, bd_ref,
         o_ref, xpad_ref, hpad_ref) = refs
    else:
        (x_ref, w1_ref, b1_ref, w2_ref, b2_ref,
         o_ref, xpad_ref, hpad_ref) = refs
        wd_ref = bd_ref = None

    K = kernel_size
    pad = dilation * (K - 1)
    L, c_in = x_ref.shape
    c_out = w1_ref.shape[2]

    x = x_ref[...].astype(jnp.float32)

    def mm(a, b):
        return jnp.dot(a.astype(compute_dtype), b.astype(compute_dtype),
                       preferred_element_type=jnp.float32)

    # ---- conv1: causal dilated conv as K shifted matmuls --------------------
    if pad > 0:
        xpad_ref[pl.ds(0, pad), :] = jnp.zeros((pad, c_in), jnp.float32)
    xpad_ref[pl.ds(pad, L), :] = x

    h1 = jnp.zeros((L, c_out), jnp.float32)
    for k in range(K):
        shift = dilation * (K - 1 - k)          # how far back tap k looks
        xs = x if shift == 0 else xpad_ref[pl.ds(pad - shift, L), :]
        h1 = h1 + mm(xs, w1_ref[k])
    h1 = jnp.maximum(h1 + b1_ref[...], 0.0)
    # TODO(synk): nn.Dropout(p=0.2) is identity in eval mode; training-mode
    # stochastic masking (pltpu.prng_seed + prng_random_bits) not implemented.

    # ---- conv2 ---------------------------------------------------------------
    if pad > 0:
        hpad_ref[pl.ds(0, pad), :] = jnp.zeros((pad, c_out), jnp.float32)
    hpad_ref[pl.ds(pad, L), :] = h1

    h2 = jnp.zeros((L, c_out), jnp.float32)
    for k in range(K):
        shift = dilation * (K - 1 - k)
        hs = h1 if shift == 0 else hpad_ref[pl.ds(pad - shift, L), :]
        h2 = h2 + mm(hs, w2_ref[k])
    h2 = jnp.maximum(h2 + b2_ref[...], 0.0)

    # ---- residual + final ReLU ----------------------------------------------
    if has_downsample:
        res = mm(x, wd_ref[...]) + bd_ref[...]
    else:
        res = x
    o_ref[...] = jnp.maximum(h2 + res, 0.0).astype(o_ref.dtype)


def temporal_block_forward(x_blc, w1, b1, w2, b2, wd, bd, *,
                           kernel_size, dilation, compute_dtype=jnp.float32):
    """One TemporalBlock.

    x_blc: (B, L, C_in) channels-last.
    w1: (K, C_in, C_out), w2: (K, C_out, C_out), b1/b2: (1, C_out)
    wd: (C_in, C_out) or None, bd: (1, C_out) or None.
    """
    B, L, c_in = x_blc.shape
    c_out = w1.shape[2]
    K = kernel_size
    pad = dilation * (K - 1)
    has_ds = wd is not None

    kernel = functools.partial(
        temporal_block_kernel, kernel_size=K, dilation=dilation,
        has_downsample=has_ds, compute_dtype=compute_dtype)

    in_specs = [
        pl.BlockSpec((None, L, c_in), lambda b: (b, 0, 0)),    # x: one batch row
        pl.BlockSpec((K, c_in, c_out), lambda b: (0, 0, 0)),   # W1 (resident)
        pl.BlockSpec((1, c_out), lambda b: (0, 0)),            # b1
        pl.BlockSpec((K, c_out, c_out), lambda b: (0, 0, 0)),  # W2 (resident)
        pl.BlockSpec((1, c_out), lambda b: (0, 0)),            # b2
    ]
    args = [x_blc, w1, b1, w2, b2]
    if has_ds:
        in_specs += [pl.BlockSpec((c_in, c_out), lambda b: (0, 0)),   # Wd
                     pl.BlockSpec((1, c_out), lambda b: (0, 0))]      # bd
        args += [wd, bd]

    # Advisory cost hint for XLA's scheduler.
    flops = 2 * B * L * K * c_in * c_out + 2 * B * L * K * c_out * c_out
    if has_ds:
        flops += 2 * B * L * c_in * c_out
    bytes_accessed = 4 * (x_blc.size + B * L * c_out
                          + sum(int(a.size) for a in args[1:]))
    cost = pl.CostEstimate(flops=flops, transcendentals=0,
                           bytes_accessed=bytes_accessed)

    return pl.pallas_call(
        kernel,
        out_shape=jax.ShapeDtypeStruct((B, L, c_out), x_blc.dtype),
        grid=(B,),
        in_specs=in_specs,
        out_specs=pl.BlockSpec((None, L, c_out), lambda b: (b, 0, 0)),
        scratch_shapes=[pltpu.VMEM((pad + L, c_in), jnp.float32),
                        pltpu.VMEM((pad + L, c_out), jnp.float32)],
        compiler_params=pltpu.CompilerParams(
            dimension_semantics=("parallel",)),
        cost_estimate=cost,
    )(*args)


def temporal_conv_net_forward(x_bcl, levels, *, kernel_size,
                              compute_dtype=jnp.float32):
    """x_bcl: (B, C, L) exactly like the PyTorch module; returns (B, C_last, L)."""
    x = jnp.transpose(x_bcl, (0, 2, 1))                  # -> (B, L, C) lane-dense
    for lvl in levels:
        # Convert PyTorch-layout params (O, I, K) to kernel layout (K, I, O).
        w1 = jnp.transpose(lvl["w1"], (2, 1, 0))
        w2 = jnp.transpose(lvl["w2"], (2, 1, 0))
        b1 = lvl["b1"][None, :]
        b2 = lvl["b2"][None, :]
        wd = None if lvl["wd"] is None else jnp.transpose(lvl["wd"][:, :, 0])
        bd = None if lvl["bd"] is None else lvl["bd"][None, :]
        x = temporal_block_forward(x, w1, b1, w2, b2, wd, bd,
                                   kernel_size=kernel_size,
                                   dilation=lvl["dilation"],
                                   compute_dtype=compute_dtype)
    return jnp.transpose(x, (0, 2, 1))                   # back to (B, C, L)


def _fold_weight_norm(v, g):
    # weight_norm (dim=0): w = g * v / ||v||, norm per output channel over
    # (in_channels, kernel). Folded once — inference-equivalent.
    norm = jnp.sqrt(jnp.sum(v * v, axis=(1, 2), keepdims=True))
    return g[:, None, None] * v / norm


def init_params(key, num_inputs, num_channels, kernel_size):
    levels = []
    c_in = num_inputs
    for i, c_out in enumerate(num_channels):
        key, k1, k2, k3, k4, k5, k6, k7, k8 = jax.random.split(key, 9)
        dilation = 2 ** i
        fan1 = c_in * kernel_size
        fan2 = c_out * kernel_size
        v1 = 0.01 * jax.random.normal(k1, (c_out, c_in, kernel_size), jnp.float32)
        g1 = jax.random.uniform(k2, (c_out,), jnp.float32, 0.5, 1.5)
        v2 = 0.01 * jax.random.normal(k3, (c_out, c_out, kernel_size), jnp.float32)
        g2 = jax.random.uniform(k4, (c_out,), jnp.float32, 0.5, 1.5)
        b1 = jax.random.uniform(k5, (c_out,), jnp.float32,
                                -1.0 / math.sqrt(fan1), 1.0 / math.sqrt(fan1))
        b2 = jax.random.uniform(k6, (c_out,), jnp.float32,
                                -1.0 / math.sqrt(fan2), 1.0 / math.sqrt(fan2))
        if c_in != c_out:
            wd = 0.01 * jax.random.normal(k7, (c_out, c_in, 1), jnp.float32)
            bd = jax.random.uniform(k8, (c_out,), jnp.float32,
                                    -1.0 / math.sqrt(c_in), 1.0 / math.sqrt(c_in))
        else:
            wd = bd = None
        levels.append(dict(w1=_fold_weight_norm(v1, g1), b1=b1,
                           w2=_fold_weight_norm(v2, g2), b2=b2,
                           wd=wd, bd=bd, dilation=dilation))
        c_in = c_out
    return levels


# ---------------------- pure-JAX reference (independent) ----------------------
def _causal_conv1d_ref(x, w_oik, b, dilation):
    # PyTorch Conv1d (cross-correlation) with padding p on both sides followed
    # by Chomp1d(p) == left-only padding of p.
    K = w_oik.shape[-1]
    pad = dilation * (K - 1)
    y = jax.lax.conv_general_dilated(
        x, w_oik, window_strides=(1,), padding=[(pad, 0)],
        rhs_dilation=(dilation,), dimension_numbers=("NCH", "OIH", "NCH"))
    return y + b[None, :, None]


def reference_forward(x_bcl, levels, *, kernel_size):
    x = x_bcl
    for lvl in levels:
        out = jax.nn.relu(_causal_conv1d_ref(x, lvl["w1"], lvl["b1"], lvl["dilation"]))
        out = jax.nn.relu(_causal_conv1d_ref(out, lvl["w2"], lvl["b2"], lvl["dilation"]))
        if lvl["wd"] is None:
            res = x
        else:
            res = (jnp.einsum("oi,bil->bol", lvl["wd"][:, :, 0], x)
                   + lvl["bd"][None, :, None])
        x = jax.nn.relu(out + res)
    return x


if __name__ == "__main__":
    batch = 2
    num_inputs = 4
    seq_len = 16
    num_channels = [32, 32]          # two levels: dilation 1 then 2
    kernel_size = 2

    key = jax.random.PRNGKey(0)
    kx, kp = jax.random.split(key)
    x = jax.random.normal(kx, (batch, num_inputs, seq_len), jnp.float32)
    params = init_params(kp, num_inputs, num_channels, kernel_size)

    out = temporal_conv_net_forward(x, params, kernel_size=kernel_size)
    out = jax.block_until_ready(out)

    ref = reference_forward(x, params, kernel_size=kernel_size)
    assert out.shape == (batch, num_channels[-1], seq_len), out.shape
    assert jnp.allclose(out, ref, atol=1e-5, rtol=1e-4), (out, ref)
    print("KERNEL_OK")
</pallas_src>

<mosaic_0001>
module attributes {stable_mosaic.version = 11 : i64} {
  func.func @temporal_block_kernel(%arg0: i32, %arg1: memref<1x16x4xf32, #tpu.memory_space<vmem>>, %arg2: memref<2x4x32xf32, #tpu.memory_space<vmem>>, %arg3: memref<1x32xf32, #tpu.memory_space<vmem>>, %arg4: memref<2x32x32xf32, #tpu.memory_space<vmem>>, %arg5: memref<1x32xf32, #tpu.memory_space<vmem>>, %arg6: memref<4x32xf32, #tpu.memory_space<vmem>>, %arg7: memref<1x32xf32, #tpu.memory_space<vmem>>, %arg8: memref<1x16x32xf32, #tpu.memory_space<vmem>>, %arg9: memref<17x4xf32, #tpu.memory_space<vmem>>, %arg10: memref<17x32xf32, #tpu.memory_space<vmem>>) attributes {dimension_semantics = [#tpu.dimension_semantics<parallel>], iteration_bounds = array<i64: 2>, scalar_prefetch = 0 : i64, scratch_operands = 2 : i64, tpu.core_type = #tpu.core_type<tc>, window_params = [{transform_indices = @transform_0, window_bounds = array<i64: 1, 16, 4>}, {pipeline_mode = #tpu.pipeline_mode<synchronous>, transform_indices = @transform_1, window_bounds = array<i64: 2, 4, 32>}, {pipeline_mode = #tpu.pipeline_mode<synchronous>, transform_indices = @transform_2, window_bounds = array<i64: 1, 32>}, {pipeline_mode = #tpu.pipeline_mode<synchronous>, transform_indices = @transform_3, window_bounds = array<i64: 2, 32, 32>}, {pipeline_mode = #tpu.pipeline_mode<synchronous>, transform_indices = @transform_4, window_bounds = array<i64: 1, 32>}, {pipeline_mode = #tpu.pipeline_mode<synchronous>, transform_indices = @transform_5, window_bounds = array<i64: 4, 32>}, {pipeline_mode = #tpu.pipeline_mode<synchronous>, transform_indices = @transform_6, window_bounds = array<i64: 1, 32>}, {transform_indices = @transform_7, window_bounds = array<i64: 1, 16, 32>}]} {
    %c0 = arith.constant 0 : index
    %c0_0 = arith.constant 0 : index
    %c0_1 = arith.constant 0 : index
    %0 = vector.load %arg1[%c0, %c0_0, %c0_1] : memref<1x16x4xf32, #tpu.memory_space<vmem>>, vector<1x16x4xf32>
    %1 = vector.shape_cast %0 : vector<1x16x4xf32> to vector<16x4xf32>
    %cst = arith.constant 0.000000e+00 : f32
    %2 = vector.broadcast %cst : f32 to vector<1x4xf32>
    %c0_2 = arith.constant 0 : index
    %c0_3 = arith.constant 0 : index
    %3 = vector.load %arg9[%c0_2, %c0_3] : memref<17x4xf32, #tpu.memory_space<vmem>>, vector<1x4xf32>
    tpu.vector_store %arg9[%c0_2, %c0_3], %2 {strides = array<i32>} : memref<17x4xf32, #tpu.memory_space<vmem>>, vector<1x4xf32>,
    %c1 = arith.constant 1 : index
    %c0_4 = arith.constant 0 : index
    %4 = vector.load %arg9[%c1, %c0_4] : memref<17x4xf32, #tpu.memory_space<vmem>>, vector<16x4xf32>
    tpu.vector_store %arg9[%c1, %c0_4], %1 {strides = array<i32>} : memref<17x4xf32, #tpu.memory_space<vmem>>, vector<16x4xf32>,
    %cst_5 = arith.constant 0.000000e+00 : f32
    %5 = vector.broadcast %cst_5 : f32 to vector<16x32xf32>
    %c0_6 = arith.constant 0 : index
    %c0_7 = arith.constant 0 : index
    %6 = vector.load %arg9[%c0_6, %c0_7] : memref<17x4xf32, #tpu.memory_space<vmem>>, vector<16x4xf32>
    %c0_8 = arith.constant 0 : index
    %c0_9 = arith.constant 0 : index
    %c0_10 = arith.constant 0 : index
    %7 = vector.load %arg2[%c0_8, %c0_9, %c0_10] : memref<2x4x32xf32, #tpu.memory_space<vmem>>, vector<1x4x32xf32>
    %8 = vector.shape_cast %7 : vector<1x4x32xf32> to vector<4x32xf32>
    %cst_11 = arith.constant dense<0.000000e+00> : vector<16x32xf32>
    %9 = tpu.matmul %6, %8, %cst_11 {dimension_numbers = #tpu.dot_dimension_numbers<[1], [0], [0], [1], [0, 0, 1, 1], [], []>} : vector<16x4xf32>, vector<4x32xf32>, vector<16x32xf32> -> vector<16x32xf32>
    %10 = arith.addf %5, %9 : vector<16x32xf32>
    %c1_12 = arith.constant 1 : index
    %c0_13 = arith.constant 0 : index
    %c0_14 = arith.constant 0 : index
    %11 = vector.load %arg2[%c1_12, %c0_13, %c0_14] : memref<2x4x32xf32, #tpu.memory_space<vmem>>, vector<1x4x32xf32>
    %12 = vector.shape_cast %11 : vector<1x4x32xf32> to vector<4x32xf32>
    %cst_15 = arith.constant dense<0.000000e+00> : vector<16x32xf32>
    %13 = tpu.matmul %1, %12, %cst_15 {dimension_numbers = #tpu.dot_dimension_numbers<[1], [0], [0], [1], [0, 0, 1, 1], [], []>} : vector<16x4xf32>, vector<4x32xf32>, vector<16x32xf32> -> vector<16x32xf32>
    %14 = arith.addf %10, %13 : vector<16x32xf32>
    %c0_16 = arith.constant 0 : index
    %c0_17 = arith.constant 0 : index
    %15 = vector.load %arg3[%c0_16, %c0_17] : memref<1x32xf32, #tpu.memory_space<vmem>>, vector<1x32xf32>
    %16 = vector.broadcast %15 : vector<1x32xf32> to vector<16x32xf32>
    %17 = arith.addf %14, %16 : vector<16x32xf32>
    %cst_18 = arith.constant 0.000000e+00 : f32
    %18 = vector.broadcast %cst_18 : f32 to vector<16x32xf32>
    %19 = arith.maximumf %17, %18 : vector<16x32xf32>
    %cst_19 = arith.constant 0.000000e+00 : f32
    %20 = vector.broadcast %cst_19 : f32 to vector<1x32xf32>
    %c0_20 = arith.constant 0 : index
    %c0_21 = arith.constant 0 : index
    %21 = vector.load %arg10[%c0_20, %c0_21] : memref<17x32xf32, #tpu.memory_space<vmem>>, vector<1x32xf32>
    tpu.vector_store %arg10[%c0_20, %c0_21], %20 {strides = array<i32>} : memref<17x32xf32, #tpu.memory_space<vmem>>, vector<1x32xf32>,
    %c1_22 = arith.constant 1 : index
    %c0_23 = arith.constant 0 : index
    %22 = vector.load %arg10[%c1_22, %c0_23] : memref<17x32xf32, #tpu.memory_space<vmem>>, vector<16x32xf32>
    tpu.vector_store %arg10[%c1_22, %c0_23], %19 {strides = array<i32>} : memref<17x32xf32, #tpu.memory_space<vmem>>, vector<16x32xf32>,
    %cst_24 = arith.constant 0.000000e+00 : f32
    %23 = vector.broadcast %cst_24 : f32 to vector<16x32xf32>
    %c0_25 = arith.constant 0 : index
    %c0_26 = arith.constant 0 : index
    %24 = vector.load %arg10[%c0_25, %c0_26] : memref<17x32xf32, #tpu.memory_space<vmem>>, vector<16x32xf32>
    %c0_27 = arith.constant 0 : index
    %c0_28 = arith.constant 0 : index
    %c0_29 = arith.constant 0 : index
    %25 = vector.load %arg4[%c0_27, %c0_28, %c0_29] : memref<2x32x32xf32, #tpu.memory_space<vmem>>, vector<1x32x32xf32>
    %26 = vector.shape_cast %25 : vector<1x32x32xf32> to vector<32x32xf32>
    %cst_30 = arith.constant dense<0.000000e+00> : vector<16x32xf32>
    %27 = tpu.matmul %24, %26, %cst_30 {dimension_numbers = #tpu.dot_dimension_numbers<[1], [0], [0], [1], [0, 0, 1, 1], [], []>} : vector<16x32xf32>, vector<32x32xf32>, vector<16x32xf32> -> vector<16x32xf32>
    %28 = arith.addf %23, %27 : vector<16x32xf32>
    %c1_31 = arith.constant 1 : index
    %c0_32 = arith.constant 0 : index
    %c0_33 = arith.constant 0 : index
    %29 = vector.load %arg4[%c1_31, %c0_32, %c0_33] : memref<2x32x32xf32, #tpu.memory_space<vmem>>, vector<1x32x32xf32>
    %30 = vector.shape_cast %29 : vector<1x32x32xf32> to vector<32x32xf32>
    %cst_34 = arith.constant dense<0.000000e+00> : vector<16x32xf32>
    %31 = tpu.matmul %19, %30, %cst_34 {dimension_numbers = #tpu.dot_dimension_numbers<[1], [0], [0], [1], [0, 0, 1, 1], [], []>} : vector<16x32xf32>, vector<32x32xf32>, vector<16x32xf32> -> vector<16x32xf32>
    %32 = arith.addf %28, %31 : vector<16x32xf32>
    %c0_35 = arith.constant 0 : index
    %c0_36 = arith.constant 0 : index
    %33 = vector.load %arg5[%c0_35, %c0_36] : memref<1x32xf32, #tpu.memory_space<vmem>>, vector<1x32xf32>
    %34 = vector.broadcast %33 : vector<1x32xf32> to vector<16x32xf32>
    %35 = arith.addf %32, %34 : vector<16x32xf32>
    %cst_37 = arith.constant 0.000000e+00 : f32
    %36 = vector.broadcast %cst_37 : f32 to vector<16x32xf32>
    %37 = arith.maximumf %35, %36 : vector<16x32xf32>
    %c0_38 = arith.constant 0 : index
    %c0_39 = arith.constant 0 : index
    %38 = vector.load %arg6[%c0_38, %c0_39] : memref<4x32xf32, #tpu.memory_space<vmem>>, vector<4x32xf32>
    %cst_40 = arith.constant dense<0.000000e+00> : vector<16x32xf32>
    %39 = tpu.matmul %1, %38, %cst_40 {dimension_numbers = #tpu.dot_dimension_numbers<[1], [0], [0], [1], [0, 0, 1, 1], [], []>} : vector<16x4xf32>, vector<4x32xf32>, vector<16x32xf32> -> vector<16x32xf32>
    %c0_41 = arith.constant 0 : index
    %c0_42 = arith.constant 0 : index
    %40 = vector.load %arg7[%c0_41, %c0_42] : memref<1x32xf32, #tpu.memory_space<vmem>>, vector<1x32xf32>
    %41 = vector.broadcast %40 : vector<1x32xf32> to vector<16x32xf32>
    %42 = arith.addf %39, %41 : vector<16x32xf32>
    %43 = arith.addf %37, %42 : vector<16x32xf32>
    %cst_43 = arith.constant 0.000000e+00 : f32
    %44 = vector.broadcast %cst_43 : f32 to vector<16x32xf32>
    %45 = arith.maximumf %43, %44 : vector<16x32xf32>
    %c0_44 = arith.constant 0 : index
    %c0_45 = arith.constant 0 : index
    %c0_46 = arith.constant 0 : index
    %46 = vector.load %arg8[%c0_44, %c0_45, %c0_46] : memref<1x16x32xf32, #tpu.memory_space<vmem>>, vector<1x16x32xf32>
    %47 = vector.shape_cast %46 : vector<1x16x32xf32> to vector<16x32xf32>
    %48 = vector.shape_cast %45 : vector<16x32xf32> to vector<1x16x32xf32>
    tpu.vector_store %arg8[%c0_44, %c0_45, %c0_46], %48 {strides = array<i32>} : memref<1x16x32xf32, #tpu.memory_space<vmem>>, vector<1x16x32xf32>,
    return
  }
  func.func @transform_0(%arg0: i32) -> (i32, i32, i32) {
    %c0_i32 = arith.constant 0 : i32
    %c0_i32_0 = arith.constant 0 : i32
    %c0_i32_1 = arith.constant 0 : i32
    return %arg0, %c0_i32, %c0_i32_0 : i32, i32, i32
  }
  func.func @transform_1(%arg0: i32) -> (i32, i32, i32) {
    %c0_i32 = arith.constant 0 : i32
    %c0_i32_0 = arith.constant 0 : i32
    %c0_i32_1 = arith.constant 0 : i32
    %c0_i32_2 = arith.constant 0 : i32
    return %c0_i32, %c0_i32_0, %c0_i32_1 : i32, i32, i32
  }
  func.func @transform_2(%arg0: i32) -> (i32, i32) {
    %c0_i32 = arith.constant 0 : i32
    %c0_i32_0 = arith.constant 0 : i32
    %c0_i32_1 = arith.constant 0 : i32
    return %c0_i32, %c0_i32_0 : i32, i32
  }
  func.func @transform_3(%arg0: i32) -> (i32, i32, i32) {
    %c0_i32 = arith.constant 0 : i32
    %c0_i32_0 = arith.constant 0 : i32
    %c0_i32_1 = arith.constant 0 : i32
    %c0_i32_2 = arith.constant 0 : i32
    return %c0_i32, %c0_i32_0, %c0_i32_1 : i32, i32, i32
  }
  func.func @transform_4(%arg0: i32) -> (i32, i32) {
    %c0_i32 = arith.constant 0 : i32
    %c0_i32_0 = arith.constant 0 : i32
    %c0_i32_1 = arith.constant 0 : i32
    return %c0_i32, %c0_i32_0 : i32, i32
  }
  func.func @transform_5(%arg0: i32) -> (i32, i32) {
    %c0_i32 = arith.constant 0 : i32
    %c0_i32_0 = arith.constant 0 : i32
    %c0_i32_1 = arith.constant 0 : i32
    return %c0_i32, %c0_i32_0 : i32, i32
  }
  func.func @transform_6(%arg0: i32) -> (i32, i32) {
    %c0_i32 = arith.constant 0 : i32
    %c0_i32_0 = arith.constant 0 : i32
    %c0_i32_1 = arith.constant 0 : i32
    return %c0_i32, %c0_i32_0 : i32, i32
  }
  func.func @transform_7(%arg0: i32) -> (i32, i32, i32) {
    %c0_i32 = arith.constant 0 : i32
    %c0_i32_0 = arith.constant 0 : i32
    %c0_i32_1 = arith.constant 0 : i32
    return %arg0, %c0_i32, %c0_i32_0 : i32, i32, i32
  }
}

</mosaic_0001>

<llo_original>
// kernel: tpu_custom_call.1
$region0: #{tpu_custom_call.1}
  #allocation0 [shape = 'u32[]', space=smem, size = 0x4, offset = 0x4, fixed_abs, tag = 'smem constant byte address 0x4 - core index']
  #allocation1 [shape = 'u32[72,128]{1,0:T(1,128)}', space=vmem, size = 0x9000, scoped, tag = 'internal scratch']
  #allocation2 [shape = 'f32[17,4]{1,0:T(8,128)}', space=vmem, size = 0x3000, scoped, tag = 'scratch operand']
  #allocation3 [shape = 'f32[17,32]{1,0:T(8,128)}', space=vmem, size = 0x3000, scoped, tag = 'scratch operand']
  %s0 = inlined_call_operand.vmem [shape: f32[2,16,4], index: 0, kind: input, shape index: {}]
  %s1 = inlined_call_operand.vmem [shape: f32[2,4,32], index: 1, kind: input, shape index: {}]
  %s2 = inlined_call_operand.vmem [shape: f32[1,32], index: 2, kind: input, shape index: {}]
  %s3 = inlined_call_operand.hbm [shape: f32[2,32,32], index: 3, kind: input, shape index: {}]
  %s4 = inlined_call_operand.vmem [shape: f32[1,32], index: 4, kind: input, shape index: {}]
  %s5 = inlined_call_operand.vmem [shape: f32[4,32], index: 5, kind: input, shape index: {}]
  %s6 = inlined_call_operand.vmem [shape: f32[1,32], index: 6, kind: input, shape index: {}]
  %s7 = inlined_call_operand.hbm [shape: f32[2,16,32], index: 7, kind: output, shape index: {}]
  %s8 = sld [smem:[#allocation0]]
  $region65: #{tpu_custom_call.1} parent=0
    _
  %s10 = ssub.s32 1, %s8
  %s11 = scalar_select 0, %s10, %s8
  $region1: #{tpu_custom_call.1} parent=0
    #allocation4 [shape = 'u8[32768]{0}', space=vmem, size = 0x8000, scoped, tag = 'input window, operand 3, single buffered']
    #allocation5 [shape = 's32[2]{0}', space=sflag, size = 0x8, scoped, tag = 'scoped memory for tpu_custom_call.1']
    #allocation6 [shape = 's32[2]{0}', space=sflag, size = 0x8, scoped, tag = 'scoped memory for tpu_custom_call.1']
    #allocation7 [shape = 'u8[16384]{0}', space=vmem, size = 0x4000, scoped, tag = 'output window, operand 0']
    %12 = vsyncpa [#allocation5], 0
    %13 = vsyncpa [#allocation6], 0
    %s14 = scalar_lea.sflag [#allocation6], 1
    %15 = vsyncpa %s14, 0
    loop: start=0, step=1, limit=4
    $region2: #{tpu_custom_call.1} parent=1 // loop_pre_header
      _
    $region3: #{tpu_custom_call.1} parent=1 // loop_header
      %s17 = sphi 0, %s21
      %p18 = scmp.ge.s32.totalorder %s17, 4
      %s27 = sphi 0, %s29
      %s30 = sphi 0, %s27
      %s31 = sphi 0, %s30
      %s47 = sphi 0, %s31
      %s51 = sphi 0, %s51
      %s53 = sphi 0, %s51
      %s54 = sphi 0, %s53
      %s68 = sphi 0, %s54
      %s72 = sphi 0, %s72
      %s74 = sphi 0, %s72
      %s75 = sphi 0, %s74
      %s89 = sphi 0, %s75
      %s93 = sphi 0, %s93
      %s95 = sphi 0, %s93
      %s96 = sphi 0, %s95
      %s110 = sphi 0, %s96
      %s114 = sphi 0, %s114
      %s116 = sphi 0, %s114
      %s117 = sphi 0, %s116
      %s131 = sphi 0, %s117
      %s135 = sphi 0, %s135
      %s137 = sphi 0, %s135
      %s138 = sphi 0, %s137
      %s152 = sphi 0, %s138
      %s156 = sphi 0, %s156
      %s158 = sphi 0, %s156
      %s159 = sphi 0, %s158
      %s173 = sphi 0, %s159
      %s179 = sphi 0, %s181
      %s182 = sphi 0, %s179
      %s183 = sphi 0, %s182
      %s199 = sphi 0, %s183
    $region4: #{tpu_custom_call.1} parent=1 // loop_header_branch
      %20 = sbr.rel (%p18) target = $region8
    $region5: #{tpu_custom_call.1} parent=1 // loop_body
      %s22 = ssub.s32 %s17, 1
      %s23 = ssub.s32 %s17, 2
      %s24 = sadd.s32 %s17, 1
      %s25 = ssub.s32 %s17, %s24
      %p26 = scmp.eq.s32.totalorder %s25, 0
      %s28 = sadd.s32 %s27, 1
      %s29 = scalar_select %p26, %s27, %s28
      %p32 = pneg %p26
      %p33 = scmp.eq.s32.totalorder %s17, 1
      %p34 = por %p32, %p33
      %p35 = scmp.ne.s32.totalorder %s27, %s30
      %p36 = scmp.eq.s32.totalorder %s17, 0
      %p37 = por %p35, %p36
      %p38 = scmp.ne.s32.totalorder %s27, %s30
      %p39 = scmp.eq.s32.totalorder %s22, 1
      %p40 = por %p38, %p39
      %p41 = scmp.ne.s32.totalorder %s30, %s31
      %p42 = scmp.eq.s32.totalorder %s22, 0
      %p43 = por %p41, %p42
      %p44 = scmp.ne.s32.totalorder %s30, %s31
      %p45 = scmp.eq.s32.totalorder %s23, 1
      %p46 = por %p44, %p45
      %p48 = scmp.ne.s32.totalorder %s31, %s47
      %p49 = scmp.eq.s32.totalorder %s23, 0
      %p50 = por %p48, %p49
      %s52 = sadd.s32 %s51, 1
      %p55 = scmp.eq.s32.totalorder %s17, 1
      %p56 = scmp.ne.s32.totalorder %s51, %s53
      %p57 = scmp.eq.s32.totalorder %s17, 0
      %p58 = por %p56, %p57
      %p59 = scmp.ne.s32.totalorder %s51, %s53
      %p60 = scmp.eq.s32.totalorder %s22, 1
      %p61 = por %p59, %p60
      %p62 = scmp.ne.s32.totalorder %s53, %s54
      %p63 = scmp.eq.s32.totalorder %s22, 0
      %p64 = por %p62, %p63
      %p65 = scmp.ne.s32.totalorder %s53, %s54
      %p66 = scmp.eq.s32.totalorder %s23, 1
      %p67 = por %p65, %p66
      %p69 = scmp.ne.s32.totalorder %s54, %s68
      %p70 = scmp.eq.s32.totalorder %s23, 0
      %p71 = por %p69, %p70
      %s73 = sadd.s32 %s72, 1
      %p76 = scmp.eq.s32.totalorder %s17, 1
      %p77 = scmp.ne.s32.totalorder %s72, %s74
      %p78 = scmp.eq.s32.totalorder %s17, 0
      %p79 = por %p77, %p78
      %p80 = scmp.ne.s32.totalorder %s72, %s74
      %p81 = scmp.eq.s32.totalorder %s22, 1
      %p82 = por %p80, %p81
      %p83 = scmp.ne.s32.totalorder %s74, %s75
      %p84 = scmp.eq.s32.totalorder %s22, 0
      %p85 = por %p83, %p84
      %p86 = scmp.ne.s32.totalorder %s74, %s75
      %p87 = scmp.eq.s32.totalorder %s23, 1
      %p88 = por %p86, %p87
      %p90 = scmp.ne.s32.totalorder %s75, %s89
      %p91 = scmp.eq.s32.totalorder %s23, 0
      %p92 = por %p90, %p91
      %s94 = sadd.s32 %s93, 1
      %p97 = scmp.eq.s32.totalorder %s17, 1
      %p98 = scmp.ne.s32.totalorder %s93, %s95
      %p99 = scmp.eq.s32.totalorder %s17, 0
      %p100 = por %p98, %p99
      %p101 = scmp.ne.s32.totalorder %s93, %s95
      %p102 = scmp.eq.s32.totalorder %s22, 1
      %p103 = por %p101, %p102
      %p104 = scmp.ne.s32.totalorder %s95, %s96
      %p105 = scmp.eq.s32.totalorder %s22, 0
      %p106 = por %p104, %p105
      %p107 = scmp.ne.s32.totalorder %s95, %s96
      %p108 = scmp.eq.s32.totalorder %s23, 1
      %p109 = por %p107, %p108
      %p111 = scmp.ne.s32.totalorder %s96, %s110
      %p112 = scmp.eq.s32.totalorder %s23, 0
      %p113 = por %p111, %p112
      %s115 = sadd.s32 %s114, 1
      %p118 = scmp.eq.s32.totalorder %s17, 1
      %p119 = scmp.ne.s32.totalorder %s114, %s116
      %p120 = scmp.eq.s32.totalorder %s17, 0
      %p121 = por %p119, %p120
      %p122 = scmp.ne.s32.totalorder %s114, %s116
      %p123 = scmp.eq.s32.totalorder %s22, 1
      %p124 = por %p122, %p123
      %p125 = scmp.ne.s32.totalorder %s116, %s117
      %p126 = scmp.eq.s32.totalorder %s22, 0
      %p127 = por %p125, %p126
      %p128 = scmp.ne.s32.totalorder %s116, %s117
      %p129 = scmp.eq.s32.totalorder %s23, 1
      %p130 = por %p128, %p129
      %p132 = scmp.ne.s32.totalorder %s117, %s131
      %p133 = scmp.eq.s32.totalorder %s23, 0
      %p134 = por %p132, %p133
      %s136 = sadd.s32 %s135, 1
      %p139 = scmp.eq.s32.totalorder %s17, 1
      %p140 = scmp.ne.s32.totalorder %s135, %s137
      %p141 = scmp.eq.s32.totalorder %s17, 0
      %p142 = por %p140, %p141
      %p143 = scmp.ne.s32.totalorder %s135, %s137
      %p144 = scmp.eq.s32.totalorder %s22, 1
      %p145 = por %p143, %p144
      %p146 = scmp.ne.s32.totalorder %s137, %s138
      %p147 = scmp.eq.s32.totalorder %s22, 0
      %p148 = por %p146, %p147
      %p149 = scmp.ne.s32.totalorder %s137, %s138
      %p150 = scmp.eq.s32.totalorder %s23, 1
      %p151 = por %p149, %p150
      %p153 = scmp.ne.s32.totalorder %s138, %s152
      %p154 = scmp.eq.s32.totalorder %s23, 0
      %p155 = por %p153, %p154
      %s157 = sadd.s32 %s156, 1
      %p160 = scmp.eq.s32.totalorder %s17, 1
      %p161 = scmp.ne.s32.totalorder %s156, %s158
      %p162 = scmp.eq.s32.totalorder %s17, 0
      %p163 = por %p161, %p162
      %p164 = scmp.ne.s32.totalorder %s156, %s158
      %p165 = scmp.eq.s32.totalorder %s22, 1
      %p166 = por %p164, %p165
      %p167 = scmp.ne.s32.totalorder %s158, %s159
      %p168 = scmp.eq.s32.totalorder %s22, 0
      %p169 = por %p167, %p168
      %p170 = scmp.ne.s32.totalorder %s158, %s159
      %p171 = scmp.eq.s32.totalorder %s23, 1
      %p172 = por %p170, %p171
      %p174 = scmp.ne.s32.totalorder %s159, %s173
      %p175 = scmp.eq.s32.totalorder %s23, 0
      %p176 = por %p174, %p175
      %s177 = ssub.s32 %s17, %s24
      %p178 = scmp.eq.s32.totalorder %s177, 0
      %s180 = sadd.s32 %s179, 1
      %s181 = scalar_select %p178, %s179, %s180
      %p184 = pneg %p178
      %p185 = scmp.eq.s32.totalorder %s17, 1
      %p186 = por %p184, %p185
      %p187 = scmp.ne.s32.totalorder %s179, %s182
      %p188 = scmp.eq.s32.totalorder %s17, 0
      %p189 = por %p187, %p188
      %p190 = scmp.ne.s32.totalorder %s179, %s182
      %p191 = scmp.eq.s32.totalorder %s22, 1
      %p192 = por %p190, %p191
      %p193 = scmp.ne.s32.totalorder %s182, %s183
      %p194 = scmp.eq.s32.totalorder %s22, 0
      %p195 = por %p193, %p194
      %p196 = scmp.ne.s32.totalorder %s182, %s183
      %p197 = scmp.eq.s32.totalorder %s23, 1
      %p198 = por %p196, %p197
      %p200 = scmp.ne.s32.totalorder %s183, %s199
      %p201 = scmp.eq.s32.totalorder %s23, 0
      %p202 = por %p200, %p201
      %p203 = scmp.le.s32.totalorder 1, %s17
      %p204 = scmp.lt.s32.totalorder %s17, 3
      %p205 = pnand %p203, %p204
      %p206 = pneg %p205
      // Predicated region
      $region9: #{tpu_custom_call.1} parent=5 // pred_check
        _
      $region10: #{tpu_custom_call.1} parent=5 // pred_check_branch
        %208 = sbr.rel (%p205) target = $region12
      $region11: #{tpu_custom_call.1} parent=5 // pred_region
        %s209 = ssub.s32 %s17, 1
        // Predicated region
        $region13: #{tpu_custom_call.1} parent=11 // pred_check
          %p210 = pneg %p64
        $region14: #{tpu_custom_call.1} parent=11 // pred_check_branch
          %212 = sbr.rel (%p210) target = $region16
        $region15: #{tpu_custom_call.1} parent=11 // pred_region
          _
        $region16: #{tpu_custom_call.1} parent=11 // pred_fallthru
          _
        // Predicated region
        $region17: #{tpu_custom_call.1} parent=11 // pred_check
          %p213 = pneg %p85
        $region18: #{tpu_custom_call.1} parent=11 // pred_check_branch
          %215 = sbr.rel (%p213) target = $region20
        $region19: #{tpu_custom_call.1} parent=11 // pred_region
          _
        $region20: #{tpu_custom_call.1} parent=11 // pred_fallthru
          _
        // Predicated region
        $region21: #{tpu_custom_call.1} parent=11 // pred_check
          %p216 = pneg %p106
        $region22: #{tpu_custom_call.1} parent=11 // pred_check_branch
          %218 = sbr.rel (%p216) target = $region24
        $region23: #{tpu_custom_call.1} parent=11 // pred_region
          %220 = vsyncadd [#allocation5], 0
          %s221 = sshll.u32 %s3, 4
          %s222 = int_to_ptr.hbm [resolvable:$true] %s221
          %s223 = sshll.u32 [#allocation4], 4
          %s224 = int_to_ptr.vmem [resolvable:$true] %s223
          %229 = dma.hbm_to_vmem [thread:$0]  %s222, 1024, %s224, [#allocation5], 128, 128, 8
        $region24: #{tpu_custom_call.1} parent=11 // pred_fallthru
          _
        // Predicated region
        $region25: #{tpu_custom_call.1} parent=11 // pred_check
          %p230 = pneg %p127
        $region26: #{tpu_custom_call.1} parent=11 // pred_check_branch
          %232 = sbr.rel (%p230) target = $region28
        $region27: #{tpu_custom_call.1} parent=11 // pred_region
          _
        $region28: #{tpu_custom_call.1} parent=11 // pred_fallthru
          _
        // Predicated region
        $region29: #{tpu_custom_call.1} parent=11 // pred_check
          %p233 = pneg %p148
        $region30: #{tpu_custom_call.1} parent=11 // pred_check_branch
          %235 = sbr.rel (%p233) target = $region32
        $region31: #{tpu_custom_call.1} parent=11 // pred_region
          _
        $region32: #{tpu_custom_call.1} parent=11 // pred_fallthru
          _
        // Predicated region
        $region33: #{tpu_custom_call.1} parent=11 // pred_check
          %p236 = pneg %p169
        $region34: #{tpu_custom_call.1} parent=11 // pred_check_branch
          %238 = sbr.rel (%p236) target = $region36
        $region35: #{tpu_custom_call.1} parent=11 // pred_region
          _
        $region36: #{tpu_custom_call.1} parent=11 // pred_fallthru
          _
      $region12: #{tpu_custom_call.1} parent=5 // pred_fallthru
        _
      %p239 = scmp.lt.s32.totalorder %s17, 2
      // Predicated region
      $region37: #{tpu_custom_call.1} parent=5 // pred_check
        %p240 = pneg %p239
      $region38: #{tpu_custom_call.1} parent=5 // pred_check_branch
        %242 = sbr.rel (%p240) target = $region40
      $region39: #{tpu_custom_call.1} parent=5 // pred_region
        // Predicated region
        $region41: #{tpu_custom_call.1} parent=39 // pred_check
          %p243 = pneg %p37
        $region42: #{tpu_custom_call.1} parent=39 // pred_check_branch
          %245 = sbr.rel (%p243) target = $region44
        $region43: #{tpu_custom_call.1} parent=39 // pred_region
          %p246 = scmp.lt.s32.totalorder %s17, 1
          %s247 = scalar_select %p246, %s17, 1
          %s248 = smul.addr %s247, 2
          %s249 = smul.addr %s248, 8
          %s250 = scalar_lea.vmem %s0, %s249
        $region44: #{tpu_custom_call.1} parent=39 // pred_fallthru
          _
      $region40: #{tpu_custom_call.1} parent=5 // pred_fallthru
        _
      %p251 = scmp.le.s32.totalorder 1, %s17
      %p252 = scmp.lt.s32.totalorder %s17, 3
      %p253 = pnand %p251, %p252
      %p254 = pneg %p253
      // Predicated region
      $region45: #{tpu_custom_call.1} parent=5 // pred_check
        _
      $region46: #{tpu_custom_call.1} parent=5 // pred_check_branch
        %256 = sbr.rel (%p253) target = $region48
      $region47: #{tpu_custom_call.1} parent=5 // pred_region
        %s257 = ssub.s32 %s17, 1
        // Predicated region
        $region49: #{tpu_custom_call.1} parent=47 // pred_check
          %p258 = pneg %p106
        $region50: #{tpu_custom_call.1} parent=47 // pred_check_branch
          %260 = sbr.rel (%p258) target = $region52
        $region51: #{tpu_custom_call.1} parent=47 // pred_region
          %262 = dma.done [#allocation5], 1024
        $region52: #{tpu_custom_call.1} parent=47 // pred_fallthru
          _
        %p263 = scmp.lt.s32.totalorder %s22, 1
        %s264 = scalar_select %p263, %s22, 1
        %s265 = smul.addr %s264, 2
        %s266 = smul.addr %s265, 8
        %s267 = scalar_lea.vmem %s0, %s266
        %p268 = pneg %p43
        %p269 = pneg %p40
        %p270 = pneg %p64
        %p271 = pneg %p61
        %p272 = pneg %p85
        %p273 = pneg %p82
        %p274 = pneg %p106
        %p275 = pneg %p103
        %p276 = pneg %p127
        %p277 = pneg %p124
        %p278 = pneg %p148
        %p279 = pneg %p145
        %p280 = pneg %p169
        %p281 = pneg %p166
        %p282 = pneg %p195
        %p283 = pneg %p192
        %s284 = sand.u32 %s182, 1
        %s285 = scalar_lea.sflag [#allocation6], %s284
        %s286 = sand.u32 %s182, 1
        %s287 = smul.addr %s286, 16
        %s288 = scalar_lea.vmem [#allocation7], %s287
        %p289 = scmp.lt.s32.totalorder %s22, 1
        %s290 = scalar_select %p289, %s22, 1
        %s291 = smul.addr %s290, 2
        %s292 = smul.addr %s291, 8
        %s293 = scalar_lea.vmem %s0, %s292
        %v294 = vld [vmem:[%s293] sm:$0xff]
        %v295 = vld [vmem:[%s293 + $0x8] sm:$0xff]
        %vm296 = vcmask 24576
        %297 = vst.msk [vmem:[#allocation2] sm:$0x1] %vm296, 0.0
        %vm298 = vcmask 31744
        %299 = vst.msk [vmem:[#allocation2 + $0x1] sm:$0xff] %vm298, %v294
        %300 = vst.msk [vmem:[#allocation2 + $0x9] sm:$0xff] %vm298, %v295
        %v301 = vld [vmem:[#allocation2] sm:$0xff]
        %v302 = vld [vmem:[#allocation2 + $0x8] sm:$0xff]
        %v303 = vld [vmem:[%s1] sm:$0xf]
        %s304 = scalar_lea.vmem %s1, 4
        %v305 = vld [vmem:[%s304] sm:$0xf]
        %v307 = vsel %vm298, %v294, 0
        %v310 = vsel %vm298, %v295, 0
        %vm312 = vcmask 1043456
        %v314 = vsel %vm312, %v305, 0
        %316 = vmatpush.msra.mxu0 0.0
        %317 = vmatpush.msra.mxu0 0.0
        %318 = vmatpush.msra.mxu0 0.0
        %319 = vmatpush.msra.mxu0 0.0
        %320 = vmatpush.msra.mxu0 0.0
        %321 = vmatpush.msra.mxu0 0.0
        %322 = vmatpush.msra.mxu0 0.0
        %323 = vmatpush.msra.mxu0 0.0
        %324 = vmatpush.msra.mxu0 0.0
        %325 = vmatpush.msra.mxu0 0.0
        %326 = vmatpush.msra.mxu0 0.0
        %327 = vmatpush.msra.mxu0 0.0
        %328 = vmatpush.msra.mxu0 0.0
        %329 = vmatpush.msra.mxu0 0.0
        %330 = vmatpush.msra.mxu0 0.0
        %331 = vmatpush.msra.mxu0 %v314
        %332 = vmatmul.f32.gmra.mxu0 %v307
        %v333 = vpop.f32.mrf.mxu0
        %v334 = vadd.f32 0.0, %v333
        %335 = vmatmul.f32.gmra.mxu0 %v310
        %v336 = vpop.f32.mrf.mxu0
        %v337 = vadd.f32 0.0, %v336
        %338 = vdwg.mxu0
        %v340 = vsel %vm298, %v301, 0
        %v343 = vsel %vm298, %v302, 0
        %v346 = vsel %vm312, %v303, 0
        %348 = vmatpush.msra.mxu0 0.0
        %349 = vmatpush.msra.mxu0 0.0
        %350 = vmatpush.msra.mxu0 0.0
        %351 = vmatpush.msra.mxu0 0.0
        %352 = vmatpush.msra.mxu0 0.0
        %353 = vmatpush.msra.mxu0 0.0
        %354 = vmatpush.msra.mxu0 0.0
        %355 = vmatpush.msra.mxu0 0.0
        %356 = vmatpush.msra.mxu0 0.0
        %357 = vmatpush.msra.mxu0 0.0
        %358 = vmatpush.msra.mxu0 0.0
        %359 = vmatpush.msra.mxu0 0.0
        %360 = vmatpush.msra.mxu0 0.0
        %361 = vmatpush.msra.mxu0 0.0
        %362 = vmatpush.msra.mxu0 0.0
        %363 = vmatpush.msra.mxu0 %v346
        %364 = vmatmul.f32.gmra.mxu0 %v340
        %v365 = vpop.f32.mrf.mxu0
        %v366 = vadd.f32 %v334, %v365
        %367 = vmatmul.f32.gmra.mxu0 %v343
        %v368 = vpop.f32.mrf.mxu0
        %v369 = vadd.f32 %v337, %v368
        %370 = vdwg.mxu0
        %v371 = vld [vmem:[%s2] sm:$0x1]
        %v373 = vperm.slane %v371, 0
        %v375 = vadd.f32 %v366, %v373
        %v376 = vadd.f32 %v369, %v373
        %v377 = vmax.f32 %v375, 0.0
        %v378 = vmax.f32 %v376, 0.0
        %vm379 = vcmask 253952
        %380 = vst.msk [vmem:[#allocation3] sm:$0x1] %vm379, 0.0
        %vm381 = vcmask 261120
        %382 = vst.msk [vmem:[#allocation3 + $0x1] sm:$0xff] %vm381, %v377
        %383 = vst.msk [vmem:[#allocation3 + $0x9] sm:$0xff] %vm381, %v378
        %v384 = vld [vmem:[#allocation3] sm:$0xff]
        %v385 = vld [vmem:[#allocation3 + $0x8] sm:$0xff]
        %v386 = vld [vmem:[#allocation4] sm:$0xff]
        %v387 = vld [vmem:[#allocation4 + $0x8] sm:$0xff]
        %v388 = vld [vmem:[#allocation4 + $0x10] sm:$0xff]
        %v389 = vld [vmem:[#allocation4 + $0x18] sm:$0xff]
        %s390 = scalar_lea.vmem [#allocation4], 32
        %v391 = vld [vmem:[%s390] sm:$0xff]
        %v392 = vld [vmem:[%s390 + $0x8] sm:$0xff]
        %v393 = vld [vmem:[%s390 + $0x10] sm:$0xff]
        %v394 = vld [vmem:[%s390 + $0x18] sm:$0xff]
        %v396 = vsel %vm381, %v377, 0
        %v399 = vsel %vm381, %v378, 0
        %401 = vmatpush.msra.mxu0 0.0
        %402 = vmatpush.msra.mxu0 0.0
        %403 = vmatpush.msra.mxu0 0.0
        %404 = vmatpush.msra.mxu0 0.0
        %405 = vmatpush.msra.mxu0 0.0
        %406 = vmatpush.msra.mxu0 0.0
        %407 = vmatpush.msra.mxu0 0.0
        %408 = vmatpush.msra.mxu0 0.0
        %409 = vmatpush.msra.mxu0 0.0
        %410 = vmatpush.msra.mxu0 0.0
        %411 = vmatpush.msra.mxu0 0.0
        %412 = vmatpush.msra.mxu0 0.0
        %413 = vmatpush.msra.mxu0 %v394
        %414 = vmatpush.msra.mxu0 %v393
        %415 = vmatpush.msra.mxu0 %v392
        %416 = vmatpush.msra.mxu0 %v391
        %417 = vmatmul.f32.gmra.mxu0 %v396
        %v418 = vpop.f32.mrf.mxu0
        %v419 = vadd.f32 0.0, %v418
        %420 = vmatmul.f32.gmra.mxu0 %v399
        %v421 = vpop.f32.mrf.mxu0
        %v422 = vadd.f32 0.0, %v421
        %423 = vdwg.mxu0
        %v425 = vsel %vm381, %v384, 0
        %v428 = vsel %vm381, %v385, 0
        %430 = vmatpush.msra.mxu0 0.0
        %431 = vmatpush.msra.mxu0 0.0
        %432 = vmatpush.msra.mxu0 0.0
        %433 = vmatpush.msra.mxu0 0.0
        %434 = vmatpush.msra.mxu0 0.0
        %435 = vmatpush.msra.mxu0 0.0
        %436 = vmatpush.msra.mxu0 0.0
        %437 = vmatpush.msra.mxu0 0.0
        %438 = vmatpush.msra.mxu0 0.0
        %439 = vmatpush.msra.mxu0 0.0
        %440 = vmatpush.msra.mxu0 0.0
        %441 = vmatpush.msra.mxu0 0.0
        %442 = vmatpush.msra.mxu0 %v389
        %443 = vmatpush.msra.mxu0 %v388
        %444 = vmatpush.msra.mxu0 %v387
        %445 = vmatpush.msra.mxu0 %v386
        %446 = vmatmul.f32.gmra.mxu0 %v425
        %v447 = vpop.f32.mrf.mxu0
        %v448 = vadd.f32 %v419, %v447
        %449 = vmatmul.f32.gmra.mxu0 %v428
        %v450 = vpop.f32.mrf.mxu0
        %v451 = vadd.f32 %v422, %v450
        %452 = vdwg.mxu0
        %v453 = vld [vmem:[%s4] sm:$0x1]
        %v455 = vperm.slane %v453, 0
        %v457 = vadd.f32 %v448, %v455
        %v458 = vadd.f32 %v451, %v455
        %v459 = vmax.f32 %v457, 0.0
        %v460 = vmax.f32 %v458, 0.0
        %v461 = vld [vmem:[%s5] sm:$0xf]
        %v462 = vld [vmem:[%s6] sm:$0x1]
        %v464 = vperm.slane %v462, 0
        %v467 = vsel %vm312, %v461, 0
        %469 = vmatpush.msra.mxu0 0.0
        %470 = vmatpush.msra.mxu0 0.0
        %471 = vmatpush.msra.mxu0 0.0
        %472 = vmatpush.msra.mxu0 0.0
        %473 = vmatpush.msra.mxu0 0.0
        %474 = vmatpush.msra.mxu0 0.0
        %475 = vmatpush.msra.mxu0 0.0
        %476 = vmatpush.msra.mxu0 0.0
        %477 = vmatpush.msra.mxu0 0.0
        %478 = vmatpush.msra.mxu0 0.0
        %479 = vmatpush.msra.mxu0 0.0
        %480 = vmatpush.msra.mxu0 0.0
        %481 = vmatpush.msra.mxu0 0.0
        %482 = vmatpush.msra.mxu0 0.0
        %483 = vmatpush.msra.mxu0 0.0
        %484 = vmatpush.msra.mxu0 %v467
        %485 = vmatmul.f32.gmra.mxu0 %v307
        %v486 = vpop.f32.mrf.mxu0
        %v487 = vadd.f32 %v464, %v486
        %488 = vmatmul.f32.gmra.mxu0 %v310
        %v489 = vpop.f32.mrf.mxu0
        %v490 = vadd.f32 %v464, %v489
        %491 = vdwg.mxu0
        %v492 = vadd.f32 %v459, %v487
        %v493 = vadd.f32 %v460, %v490
        %v494 = vmax.f32 %v492, 0.0
        %v495 = vmax.f32 %v493, 0.0
        %496 = vst.msk [vmem:[%s288] sm:$0xff] %vm381, %v494
        %497 = vst.msk [vmem:[%s288 + $0x8] sm:$0xff] %vm381, %v495
        %s498 = sand.u32 %s182, 1
        %s499 = scalar_lea.sflag [#allocation6], %s498
        %s500 = sand.u32 %s182, 1
        %s501 = smul.addr %s500, 16
        %s502 = scalar_lea.vmem [#allocation7], %s501
        // Predicated region
        $region53: #{tpu_custom_call.1} parent=47 // pred_check
          %p503 = pneg %p192
        $region54: #{tpu_custom_call.1} parent=47 // pred_check_branch
          %505 = sbr.rel (%p503) target = $region56
        $region55: #{tpu_custom_call.1} parent=47 // pred_region
          %507 = vsyncadd %s499, 0
          %s508 = smul.addr %s22, 2
          %s509 = smul.addr %s508, 8
          %s510 = scalar_lea.hbm %s7, %s509
          %s511 = sshll.u32 %s502, 4
          %s512 = int_to_ptr.vmem [resolvable:$true] %s511
          %s513 = sshll.u32 %s510, 4
          %s514 = int_to_ptr.hbm [resolvable:$true] %s513
          %519 = dma.vmem_to_hbm [thread:$0]  %s512, 256, %s514, %s499, 128, 128, 8
        $region56: #{tpu_custom_call.1} parent=47 // pred_fallthru
          _
      $region48: #{tpu_custom_call.1} parent=5 // pred_fallthru
        _
      %p520 = scmp.le.s32.totalorder 2, %s17
      // Predicated region
      $region57: #{tpu_custom_call.1} parent=5 // pred_check
        %p521 = pneg %p520
      $region58: #{tpu_custom_call.1} parent=5 // pred_check_branch
        %523 = sbr.rel (%p521) target = $region60
      $region59: #{tpu_custom_call.1} parent=5 // pred_region
        %s524 = ssub.s32 %s17, 2
        // Predicated region
        $region61: #{tpu_custom_call.1} parent=59 // pred_check
          %p525 = pneg %p198
        $region62: #{tpu_custom_call.1} parent=59 // pred_check_branch
          %527 = sbr.rel (%p525) target = $region64
        $region63: #{tpu_custom_call.1} parent=59 // pred_region
          %s528 = sand.u32 %s183, 1
          %s529 = scalar_lea.sflag [#allocation6], %s528
          %s530 = sand.u32 %s183, 1
          %s531 = smul.addr %s530, 16
          %s532 = scalar_lea.vmem [#allocation7], %s531
          %534 = dma.done %s529, 256
        $region64: #{tpu_custom_call.1} parent=59 // pred_fallthru
          _
      $region60: #{tpu_custom_call.1} parent=5 // pred_fallthru
        _
    $region6: #{tpu_custom_call.1} parent=1 // loop_footer
      %s21 = sadd.s32 1, %s17
    $region7: #{tpu_custom_call.1} parent=1 // loop_footer_branch
      %16 = sbr.rel target = $region3
    $region8: #{tpu_custom_call.1} parent=1 // loop_exit
      _
    %535 = vsyncpa [#allocation5], 1
    %s536 = scalar_lea.sflag [#allocation5], 1
    %537 = vsyncpa %s536, 1
    %538 = vsyncpa [#allocation6], 1
    %s539 = scalar_lea.sflag [#allocation6], 1
    %540 = vsyncpa %s539, 1

</llo_original>
